<compile_context>
chip_gen: v6e
topology: v6e:2x2x1
jax: 0.10.0
libtpu: 0.0.40
codegen_flags: <defaults>
</compile_context>

<pallas_src>
import functools

import jax
import jax.numpy as jnp
from jax.experimental import pallas as pl
from jax.experimental.pallas import tpu as pltpu


def _round_up(x, m):
    return (x + m - 1) // m * m


def _se_kernel(x_ref, w1t_ref, w2t_ref, out_ref, *, inv_hw):
    # x_ref   : (Bt, Cp, HWp)   Bt batch rows, padded channels / spatial
    # w1t_ref : (Cp, Hp)        W1 transposed, zero-padded
    # w2t_ref : (Hp, Cp)        W2 transposed, zero-padded
    # out_ref : (Bt, Cp, HWp)
    x = x_ref[...]                                            # (Bt, Cp, HWp)

    # --- squeeze: spatial tail is zero-padded, so sum * (1/true_HW) == mean ---
    y = jnp.sum(x, axis=-1) * inv_hw                          # (Bt, Cp)

    # --- excitation: FC -> ReLU -> FC -> Sigmoid (batched over Bt rows) ---
    h = jnp.dot(y, w1t_ref[...], preferred_element_type=jnp.float32)  # (Bt, Hp)
    h = jnp.maximum(h, 0.0)
    s = jnp.dot(h, w2t_ref[...], preferred_element_type=jnp.float32)  # (Bt, Cp)
    s = jax.nn.sigmoid(s)

    # --- scale: one hoisted broadcast of the channel gate over HW ---
    out_ref[...] = x * s[:, :, None]


def se_block_pallas(x_nchw, w1, w2, *, vmem_budget_bytes=44 * 1024 * 1024):
    """x_nchw: (B, C, H, W) f32; w1: (C//r, C); w2: (C, C//r)."""
    B, C, H, W = x_nchw.shape
    hidden = w1.shape[0]
    HW = H * W

    # ---- pad to TPU-friendly tile shapes (zero padding, exact math) ----
    Cp = _round_up(C, 8)          # sublane-aligned channel axis
    HWp = _round_up(HW, 128)      # lane-dense spatial axis (unmasked stores)
    Hp = _round_up(hidden, 128)   # lane-dense excite intermediate

    x = x_nchw.reshape(B, C, HW)
    x = jnp.pad(x, ((0, 0), (0, Cp - C), (0, HWp - HW)))

    w1t = jnp.pad(w1.T, ((0, Cp - C), (0, Hp - hidden)))      # (Cp, Hp)
    w2t = jnp.pad(w2.T, ((0, Hp - hidden), (0, Cp - C)))      # (Hp, Cp)

    # ---- pick Bt (batch rows per grid step) under a VMEM budget ----
    # Double-buffered input + output copies of the block: 4 * Bt * row_bytes.
    row_bytes = Cp * HWp * 4
    bt_max = max(1, vmem_budget_bytes // (4 * row_bytes))
    Bt = min(B, bt_max)
    # Give v7x's second TensorCore work when the batch is big enough to split.
    if B >= 4 and Bt == B:
        Bt = pl.cdiv(B, 2)
    Bp = _round_up(B, Bt)
    if Bp != B:
        x = jnp.pad(x, ((0, Bp - B), (0, 0), (0, 0)))
    # TODO(synk): if a single (1, Cp, HWp) slab ever exceeds the VMEM budget
    # (huge C*HW on v7x), restructure into a two-phase tiled squeeze + tiled
    # scale kernel instead of shrinking blocks here.

    weight_bytes = 2 * (Cp * Hp * 4) * 2       # two weights, double-buffered
    vmem_need = 4 * Bt * row_bytes + weight_bytes
    vmem_limit = int(min(60 * 1024 * 1024,
                         max(32 * 1024 * 1024, vmem_need + 8 * 1024 * 1024)))

    grid = (Bp // Bt,)
    kernel = functools.partial(_se_kernel, inv_hw=1.0 / float(HW))

    cost = pl.CostEstimate(
        flops=2 * B * C * HW + 4 * B * Cp * Hp,
        transcendentals=B * C,
        bytes_accessed=2 * B * C * HW * 4 + 2 * C * hidden * 4,
    )

    out = pl.pallas_call(
        kernel,
        out_shape=jax.ShapeDtypeStruct((Bp, Cp, HWp), x.dtype),
        grid_spec=pltpu.PrefetchScalarGridSpec(
            num_scalar_prefetch=0,
            grid=grid,
            in_specs=[
                pl.BlockSpec((Bt, Cp, HWp), lambda b: (b, 0, 0)),
                pl.BlockSpec((Cp, Hp), lambda b: (0, 0)),   # weights resident
                pl.BlockSpec((Hp, Cp), lambda b: (0, 0)),
            ],
            out_specs=pl.BlockSpec((Bt, Cp, HWp), lambda b: (b, 0, 0)),
        ),
        compiler_params=pltpu.CompilerParams(
            dimension_semantics=("parallel",),
            vmem_limit_bytes=vmem_limit,
        ),
        cost_estimate=cost,
    )(x, w1t, w2t)

    return out[:B, :C, :HW].reshape(B, C, H, W)


def se_block_ref(x_nchw, w1, w2):
    """Pure-JAX reference matching the PyTorch forward."""
    y = jnp.mean(x_nchw, axis=(2, 3))                 # (B, C)
    y = jnp.maximum(y @ w1.T, 0.0)                    # (B, C//r)
    y = jax.nn.sigmoid(y @ w2.T)                      # (B, C)
    return x_nchw * y[:, :, None, None]


def _make_inputs(key, B, C, H, W, ratio):
    hidden = max(1, C // ratio)
    kx, k1, k2 = jax.random.split(key, 3)
    x = jax.random.normal(kx, (B, C, H, W), dtype=jnp.float32)
    w1 = jax.random.uniform(k1, (hidden, C), dtype=jnp.float32,
                            minval=-1.0, maxval=1.0) * (1.0 / jnp.sqrt(C))
    w2 = jax.random.uniform(k2, (C, hidden), dtype=jnp.float32,
                            minval=-1.0, maxval=1.0) * (1.0 / jnp.sqrt(hidden))
    return x, w1, w2


if __name__ == "__main__":
    key = jax.random.PRNGKey(0)
    k_a, k_b = jax.random.split(key)

    # Case 1: shapes consistent with the module (ratio=16 needs C >= 16);
    # HW already lane-aligned -> single grid step covering the whole batch.
    x, w1, w2 = _make_inputs(k_a, B=2, C=32, H=16, W=16, ratio=16)
    out = jax.block_until_ready(se_block_pallas(x, w1, w2))
    ref = se_block_ref(x, w1, w2)
    assert out.shape == x.shape
    assert jnp.allclose(out, ref, atol=1e-5, rtol=1e-5), "case 1 mismatch"

    # Case 2: exercises the padding path (HW=49 -> 128 lanes, hidden=3 -> 128).
    x2, w1_2, w2_2 = _make_inputs(k_b, B=3, C=48, H=7, W=7, ratio=16)
    out2 = jax.block_until_ready(se_block_pallas(x2, w1_2, w2_2))
    ref2 = se_block_ref(x2, w1_2, w2_2)
    assert out2.shape == x2.shape
    assert jnp.allclose(out2, ref2, atol=1e-5, rtol=1e-5), "case 2 mismatch"

    print("KERNEL_OK")
</pallas_src>

<mosaic_0001>
module attributes {stable_mosaic.version = 11 : i64} {
  func.func @_se_kernel(%arg0: i32, %arg1: memref<2x32x256xf32, #tpu.memory_space<vmem>>, %arg2: memref<32x128xf32, #tpu.memory_space<vmem>>, %arg3: memref<128x32xf32, #tpu.memory_space<vmem>>, %arg4: memref<2x32x256xf32, #tpu.memory_space<vmem>>) attributes {dimension_semantics = [#tpu.dimension_semantics<parallel>], iteration_bounds = array<i64: 1>, scalar_prefetch = 0 : i64, scratch_operands = 0 : i64, tpu.core_type = #tpu.core_type<tc>, window_params = [{transform_indices = @transform_0, window_bounds = array<i64: 2, 32, 256>}, {pipeline_mode = #tpu.pipeline_mode<synchronous>, transform_indices = @transform_1, window_bounds = array<i64: 32, 128>}, {pipeline_mode = #tpu.pipeline_mode<synchronous>, transform_indices = @transform_2, window_bounds = array<i64: 128, 32>}, {transform_indices = @transform_3, window_bounds = array<i64: 2, 32, 256>}]} {
    %c0 = arith.constant 0 : index
    %c0_0 = arith.constant 0 : index
    %c0_1 = arith.constant 0 : index
    %0 = vector.load %arg1[%c0, %c0_0, %c0_1] : memref<2x32x256xf32, #tpu.memory_space<vmem>>, vector<2x32x256xf32>
    %cst = arith.constant dense<0.000000e+00> : vector<2x32xf32>
    %1 = vector.multi_reduction <add>, %0, %cst [2] : vector<2x32x256xf32> to vector<2x32xf32>
    %cst_2 = arith.constant 3.906250e-03 : f32
    %2 = vector.broadcast %cst_2 : f32 to vector<2x32xf32>
    %3 = arith.mulf %1, %2 : vector<2x32xf32>
    %c0_3 = arith.constant 0 : index
    %c0_4 = arith.constant 0 : index
    %4 = vector.load %arg2[%c0_3, %c0_4] : memref<32x128xf32, #tpu.memory_space<vmem>>, vector<32x128xf32>
    %cst_5 = arith.constant dense<0.000000e+00> : vector<2x128xf32>
    %5 = tpu.matmul %3, %4, %cst_5 {dimension_numbers = #tpu.dot_dimension_numbers<[1], [0], [0], [1], [0, 0, 1, 1], [], []>} : vector<2x32xf32>, vector<32x128xf32>, vector<2x128xf32> -> vector<2x128xf32>
    %cst_6 = arith.constant 0.000000e+00 : f32
    %6 = vector.broadcast %cst_6 : f32 to vector<2x128xf32>
    %7 = arith.maximumf %5, %6 : vector<2x128xf32>
    %c0_7 = arith.constant 0 : index
    %c0_8 = arith.constant 0 : index
    %8 = vector.load %arg3[%c0_7, %c0_8] : memref<128x32xf32, #tpu.memory_space<vmem>>, vector<128x32xf32>
    %cst_9 = arith.constant dense<0.000000e+00> : vector<2x32xf32>
    %9 = tpu.matmul %7, %8, %cst_9 {dimension_numbers = #tpu.dot_dimension_numbers<[1], [0], [0], [1], [0, 0, 1, 1], [], []>} : vector<2x128xf32>, vector<128x32xf32>, vector<2x32xf32> -> vector<2x32xf32>
    %10 = arith.negf %9 : vector<2x32xf32>
    %11 = math.exp %10 : vector<2x32xf32>
    %cst_10 = arith.constant 1.000000e+00 : f32
    %12 = vector.broadcast %cst_10 : f32 to vector<2x32xf32>
    %13 = arith.addf %12, %11 : vector<2x32xf32>
    %14 = arith.divf %12, %13 : vector<2x32xf32>
    %15 = vector.shape_cast %14 : vector<2x32xf32> to vector<2x32x1xf32>
    %16 = vector.broadcast %15 : vector<2x32x1xf32> to vector<2x32x256xf32>
    %17 = arith.mulf %0, %16 : vector<2x32x256xf32>
    %c0_11 = arith.constant 0 : index
    %c0_12 = arith.constant 0 : index
    %c0_13 = arith.constant 0 : index
    %18 = vector.load %arg4[%c0_11, %c0_12, %c0_13] : memref<2x32x256xf32, #tpu.memory_space<vmem>>, vector<2x32x256xf32>
    tpu.vector_store %arg4[%c0_11, %c0_12, %c0_13], %17 {strides = array<i32>} : memref<2x32x256xf32, #tpu.memory_space<vmem>>, vector<2x32x256xf32>,
    return
  }
  func.func @transform_0(%arg0: i32) -> (i32, i32, i32) {
    %c0_i32 = arith.constant 0 : i32
    %c0_i32_0 = arith.constant 0 : i32
    %c0_i32_1 = arith.constant 0 : i32
    return %arg0, %c0_i32, %c0_i32_0 : i32, i32, i32
  }
  func.func @transform_1(%arg0: i32) -> (i32, i32) {
    %c0_i32 = arith.constant 0 : i32
    %c0_i32_0 = arith.constant 0 : i32
    %c0_i32_1 = arith.constant 0 : i32
    return %c0_i32, %c0_i32_0 : i32, i32
  }
  func.func @transform_2(%arg0: i32) -> (i32, i32) {
    %c0_i32 = arith.constant 0 : i32
    %c0_i32_0 = arith.constant 0 : i32
    %c0_i32_1 = arith.constant 0 : i32
    return %c0_i32, %c0_i32_0 : i32, i32
  }
  func.func @transform_3(%arg0: i32) -> (i32, i32, i32) {
    %c0_i32 = arith.constant 0 : i32
    %c0_i32_0 = arith.constant 0 : i32
    %c0_i32_1 = arith.constant 0 : i32
    return %arg0, %c0_i32, %c0_i32_0 : i32, i32, i32
  }
}

</mosaic_0001>

<llo_original>
// kernel: tpu_custom_call.1
$region0: #{tpu_custom_call.1}
  #allocation0 [shape = 'u32[]', space=smem, size = 0x4, offset = 0x4, fixed_abs, tag = 'smem constant byte address 0x4 - core index']
  #allocation1 [shape = 'u32[144,128]{1,0:T(1,128)}', space=vmem, size = 0x12000, scoped, tag = 'internal scratch']
  %s0 = inlined_call_operand.vmem [shape: f32[2,32,256], index: 0, kind: input, shape index: {}]
  %s1 = inlined_call_operand.vmem [shape: f32[32,128], index: 1, kind: input, shape index: {}]
  %s2 = inlined_call_operand.vmem [shape: f32[128,32], index: 2, kind: input, shape index: {}]
  %s3 = inlined_call_operand.hbm [shape: f32[2,32,256], index: 3, kind: output, shape index: {}]
  %s4 = sld [smem:[#allocation0]]
  $region22: #{tpu_custom_call.1} parent=0
    _
  %s6 = ssub.s32 1, %s4
  %s7 = scalar_select 0, %s6, %s4
  $region1: #{tpu_custom_call.1} parent=0
    #allocation2 [shape = 'u8[65536]{0}', space=vmem, size = 0x10000, scoped, tag = 'output window, operand 0, single buffered']
    #allocation3 [shape = 's32[1]{0}', space=sflag, size = 0x4, scoped, tag = 'scoped memory for tpu_custom_call.1']
    %8 = vsyncpa [#allocation3], 0
    // Predicated region
    $region2: #{tpu_custom_call.1} parent=1 // pred_check
      _
    $region3: #{tpu_custom_call.1} parent=1 // pred_check_branch
      %10 = sbr.rel (0) target = $region5
    $region4: #{tpu_custom_call.1} parent=1 // pred_region
      _
    $region5: #{tpu_custom_call.1} parent=1 // pred_fallthru
      _
    // Predicated region
    $region6: #{tpu_custom_call.1} parent=1 // pred_check
      _
    $region7: #{tpu_custom_call.1} parent=1 // pred_check_branch
      %12 = sbr.rel (0) target = $region9
    $region8: #{tpu_custom_call.1} parent=1 // pred_region
      _
    $region9: #{tpu_custom_call.1} parent=1 // pred_fallthru
      _
    // Predicated region
    $region10: #{tpu_custom_call.1} parent=1 // pred_check
      _
    $region11: #{tpu_custom_call.1} parent=1 // pred_check_branch
      %14 = sbr.rel (0) target = $region13
    $region12: #{tpu_custom_call.1} parent=1 // pred_region
      _
    $region13: #{tpu_custom_call.1} parent=1 // pred_fallthru
      _
    %v15 = vld [vmem:[%s0] sm:$0xff]
    %v16 = vld [vmem:[%s0 + $0x8] sm:$0xff]
    %v17 = vld [vmem:[%s0 + $0x10] sm:$0xff]
    %v18 = vld [vmem:[%s0 + $0x18] sm:$0xff]
    %v19 = vld [vmem:[%s0 + $0x20] sm:$0xff]
    %v20 = vld [vmem:[%s0 + $0x28] sm:$0xff]
    %v21 = vld [vmem:[%s0 + $0x30] sm:$0xff]
    %v22 = vld [vmem:[%s0 + $0x38] sm:$0xff]
    %v23 = vld [vmem:[%s0 + $0x40] sm:$0xff]
    %v24 = vld [vmem:[%s0 + $0x48] sm:$0xff]
    %v25 = vld [vmem:[%s0 + $0x50] sm:$0xff]
    %v26 = vld [vmem:[%s0 + $0x58] sm:$0xff]
    %v27 = vld [vmem:[%s0 + $0x60] sm:$0xff]
    %v28 = vld [vmem:[%s0 + $0x68] sm:$0xff]
    %v29 = vld [vmem:[%s0 + $0x70] sm:$0xff]
    %v30 = vld [vmem:[%s0 + $0x78] sm:$0xff]
    %v31 = vadd.f32 %v15, %v16
    %32 = vadd.xlane.f32.xlu0 %v31
    %v33 = vpop.xlane.xlu0 %32
    %v34 = vadd.f32 %v17, %v18
    %35 = vadd.xlane.f32.xlu0 %v34
    %v36 = vpop.xlane.xlu0 %35
    %v37 = vadd.f32 %v19, %v20
    %38 = vadd.xlane.f32.xlu0 %v37
    %v39 = vpop.xlane.xlu0 %38
    %v40 = vadd.f32 %v21, %v22
    %41 = vadd.xlane.f32.xlu0 %v40
    %v42 = vpop.xlane.xlu0 %41
    %v43 = vadd.f32 %v23, %v24
    %44 = vadd.xlane.f32.xlu0 %v43
    %v45 = vpop.xlane.xlu0 %44
    %v46 = vadd.f32 %v25, %v26
    %47 = vadd.xlane.f32.xlu0 %v46
    %v48 = vpop.xlane.xlu0 %47
    %v49 = vadd.f32 %v27, %v28
    %50 = vadd.xlane.f32.xlu0 %v49
    %v51 = vpop.xlane.xlu0 %50
    %v52 = vadd.f32 %v29, %v30
    %53 = vadd.xlane.f32.xlu0 %v52
    %v54 = vpop.xlane.xlu0 %53
    %v55 = vmul.f32 %v33, 0.00390625
    %v56 = vmul.f32 %v36, 0.00390625
    %v57 = vmul.f32 %v39, 0.00390625
    %v58 = vmul.f32 %v42, 0.00390625
    %v59 = vmul.f32 %v45, 0.00390625
    %v60 = vmul.f32 %v48, 0.00390625
    %v61 = vmul.f32 %v51, 0.00390625
    %v62 = vmul.f32 %v54, 0.00390625
    %v63 = vld [vmem:[%s1] sm:$0xff]
    %v64 = vld [vmem:[%s1 + $0x8] sm:$0xff]
    %v65 = vld [vmem:[%s1 + $0x10] sm:$0xff]
    %v66 = vld [vmem:[%s1 + $0x18] sm:$0xff]
    %v75 = vlaneseq
    %v76 = vand.u32 %v75, 127
    %v77 = vlaneseq
    %v78 = vshrl.u32 %v77, 7
    %v79 = vsub.s32 %v76, %v78
    %v80 = vrot.slane %v55, %v79
    %v81 = vadd.s32 %v76, 4294967288
    %v82 = vlaneseq
    %v83 = vshrl.u32 %v82, 7
    %v84 = vsub.s32 %v81, %v83
    %v85 = vrot.slane %v56, %v84
    %vm86 = vcmask 130112
    %v87 = vsel %vm86, %v85, %v80
    %v88 = vadd.s32 %v76, 4294967280
    %v89 = vlaneseq
    %v90 = vshrl.u32 %v89, 7
    %v91 = vsub.s32 %v88, %v90
    %v92 = vrot.slane %v57, %v91
    %vm93 = vcmask 195712
    %v94 = vsel %vm93, %v92, %v87
    %v95 = vadd.s32 %v76, 4294967272
    %v96 = vlaneseq
    %v97 = vshrl.u32 %v96, 7
    %v98 = vsub.s32 %v95, %v97
    %v99 = vrot.slane %v58, %v98
    %vm100 = vcmask 261312
    %v101 = vsel %vm100, %v99, %v94
    %v102 = vlaneseq
    %v103 = vshrl.u32 %v102, 7
    %v104 = vsub.s32 %v76, %v103
    %v105 = vrot.slane %v59, %v104
    %v106 = vlaneseq
    %v107 = vshrl.u32 %v106, 7
    %v108 = vsub.s32 %v81, %v107
    %v109 = vrot.slane %v60, %v108
    %v110 = vsel %vm86, %v109, %v105
    %v111 = vlaneseq
    %v112 = vshrl.u32 %v111, 7
    %v113 = vsub.s32 %v88, %v112
    %v114 = vrot.slane %v61, %v113
    %v115 = vsel %vm93, %v114, %v110
    %v116 = vlaneseq
    %v117 = vshrl.u32 %v116, 7
    %v118 = vsub.s32 %v95, %v117
    %v119 = vrot.slane %v62, %v118
    %v120 = vsel %vm100, %v119, %v115
    %vm121 = vcmask 1041409
    %v122 = vsel %vm121, %v120, %v101
    %vm123 = vcmask 261120
    %v124 = vsel %vm123, %v122, 0
    %126 = vmatprep.subr.mxu0 0.0
    %127 = vmatpush1.msra.mxu0 0.0
    %128 = vmatprep.subr.mxu0 0.0
    %129 = vmatpush1.msra.mxu0 0.0
    %130 = vmatprep.subr.mxu0 0.0
    %131 = vmatpush1.msra.mxu0 0.0
    %132 = vmatprep.subr.mxu0 0.0
    %133 = vmatpush1.msra.mxu0 0.0
    %134 = vmatprep.subr.mxu0 0.0
    %135 = vmatpush1.msra.mxu0 0.0
    %136 = vmatprep.subr.mxu0 0.0
    %137 = vmatpush1.msra.mxu0 0.0
    %138 = vmatprep.subr.mxu0 0.0
    %139 = vmatpush1.msra.mxu0 0.0
    %140 = vmatprep.subr.mxu0 0.0
    %141 = vmatpush1.msra.mxu0 0.0
    %142 = vmatprep.subr.mxu0 0.0
    %143 = vmatpush1.msra.mxu0 0.0
    %144 = vmatprep.subr.mxu0 0.0
    %145 = vmatpush1.msra.mxu0 0.0
    %146 = vmatprep.subr.mxu0 0.0
    %147 = vmatpush1.msra.mxu0 0.0
    %148 = vmatprep.subr.mxu0 0.0
    %149 = vmatpush1.msra.mxu0 0.0
    %150 = vmatprep.subr.mxu0 0.0
    %151 = vmatpush1.msra.mxu0 %v66
    %152 = vmatprep.subr.mxu0 0.0
    %153 = vmatpush1.msra.mxu0 %v65
    %154 = vmatprep.subr.mxu0 0.0
    %155 = vmatpush1.msra.mxu0 %v64
    %156 = vmatprep.subr.mxu0 0.0
    %157 = vmatpush1.msra.mxu0 %v63
    %158 = vmatprep.subr.mxu0 0.0
    %159 = vmatpush2.msra.mxu0 0.0
    %160 = vmatprep.subr.mxu0 0.0
    %161 = vmatpush2.msra.mxu0 0.0
    %162 = vmatprep.subr.mxu0 0.0
    %163 = vmatpush2.msra.mxu0 0.0
    %164 = vmatprep.subr.mxu0 0.0
    %165 = vmatpush2.msra.mxu0 0.0
    %166 = vmatprep.subr.mxu0 0.0
    %167 = vmatpush2.msra.mxu0 0.0
    %168 = vmatprep.subr.mxu0 0.0
    %169 = vmatpush2.msra.mxu0 0.0
    %170 = vmatprep.subr.mxu0 0.0
    %171 = vmatpush2.msra.mxu0 0.0
    %172 = vmatprep.subr.mxu0 0.0
    %173 = vmatpush2.msra.mxu0 0.0
    %174 = vmatprep.subr.mxu0 0.0
    %175 = vmatpush2.msra.mxu0 0.0
    %176 = vmatprep.subr.mxu0 0.0
    %177 = vmatpush2.msra.mxu0 0.0
    %178 = vmatprep.subr.mxu0 0.0
    %179 = vmatpush2.msra.mxu0 0.0
    %180 = vmatprep.subr.mxu0 0.0
    %181 = vmatpush2.msra.mxu0 0.0
    %182 = vmatprep.subr.mxu0 0.0
    %183 = vmatpush2.msra.mxu0 0.0
    %184 = vmatprep.subr.mxu0 0.0
    %185 = vmatpush2.msra.mxu0 0.0
    %186 = vmatprep.subr.mxu0 0.0
    %187 = vmatpush2.msra.mxu0 0.0
    %188 = vmatprep.subr.mxu0 0.0
    %189 = vmatpush2.msra.mxu0 0.0
    %190 = vmatprep.mubr.f32.mxu0 0.0
    %191 = vmatmul.mubr.f32.gmra.mxu0 %v124
    %v192 = vpop.f32.mrf.mxu0
    %v193 = vadd.f32 0.0, %v192
    %v194 = vpop.f32.mrf.mxu0
    %195 = vdwg.mxu0
    %v196 = vmax.f32 %v193, 0.0
    %v197 = vld [vmem:[%s2] sm:$0xff]
    %v198 = vld [vmem:[%s2 + $0x8] sm:$0xff]
    %v199 = vld [vmem:[%s2 + $0x10] sm:$0xff]
    %v200 = vld [vmem:[%s2 + $0x18] sm:$0xff]
    %v201 = vld [vmem:[%s2 + $0x20] sm:$0xff]
    %v202 = vld [vmem:[%s2 + $0x28] sm:$0xff]
    %v203 = vld [vmem:[%s2 + $0x30] sm:$0xff]
    %v204 = vld [vmem:[%s2 + $0x38] sm:$0xff]
    %v205 = vld [vmem:[%s2 + $0x40] sm:$0xff]
    %v206 = vld [vmem:[%s2 + $0x48] sm:$0xff]
    %v207 = vld [vmem:[%s2 + $0x50] sm:$0xff]
    %v208 = vld [vmem:[%s2 + $0x58] sm:$0xff]
    %v209 = vld [vmem:[%s2 + $0x60] sm:$0xff]
    %v210 = vld [vmem:[%s2 + $0x68] sm:$0xff]
    %v211 = vld [vmem:[%s2 + $0x70] sm:$0xff]
    %v212 = vld [vmem:[%s2 + $0x78] sm:$0xff]
    %213 = vmatprep.subr.mxu0 0.0
    %214 = vmatpush1.msra.mxu0 %v212
    %215 = vmatprep.subr.mxu0 0.0
    %216 = vmatpush1.msra.mxu0 %v211
    %217 = vmatprep.subr.mxu0 0.0
    %218 = vmatpush1.msra.mxu0 %v210
    %219 = vmatprep.subr.mxu0 0.0
    %220 = vmatpush1.msra.mxu0 %v209
    %221 = vmatprep.subr.mxu0 0.0
    %222 = vmatpush1.msra.mxu0 %v208
    %223 = vmatprep.subr.mxu0 0.0
    %224 = vmatpush1.msra.mxu0 %v207
    %225 = vmatprep.subr.mxu0 0.0
    %226 = vmatpush1.msra.mxu0 %v206
    %227 = vmatprep.subr.mxu0 0.0
    %228 = vmatpush1.msra.mxu0 %v205
    %229 = vmatprep.subr.mxu0 0.0
    %230 = vmatpush1.msra.mxu0 %v204
    %231 = vmatprep.subr.mxu0 0.0
    %232 = vmatpush1.msra.mxu0 %v203
    %233 = vmatprep.subr.mxu0 0.0
    %234 = vmatpush1.msra.mxu0 %v202
    %235 = vmatprep.subr.mxu0 0.0
    %236 = vmatpush1.msra.mxu0 %v201
    %237 = vmatprep.subr.mxu0 0.0
    %238 = vmatpush1.msra.mxu0 %v200
    %239 = vmatprep.subr.mxu0 0.0
    %240 = vmatpush1.msra.mxu0 %v199
    %241 = vmatprep.subr.mxu0 0.0
    %242 = vmatpush1.msra.mxu0 %v198
    %243 = vmatprep.subr.mxu0 0.0
    %244 = vmatpush1.msra.mxu0 %v197
    %245 = vmatprep.subr.mxu0 0.0
    %246 = vmatpush2.msra.mxu0 0.0
    %247 = vmatprep.subr.mxu0 0.0
    %248 = vmatpush2.msra.mxu0 0.0
    %249 = vmatprep.subr.mxu0 0.0
    %250 = vmatpush2.msra.mxu0 0.0
    %251 = vmatprep.subr.mxu0 0.0
    %252 = vmatpush2.msra.mxu0 0.0
    %253 = vmatprep.subr.mxu0 0.0
    %254 = vmatpush2.msra.mxu0 0.0
    %255 = vmatprep.subr.mxu0 0.0
    %256 = vmatpush2.msra.mxu0 0.0
    %257 = vmatprep.subr.mxu0 0.0
    %258 = vmatpush2.msra.mxu0 0.0
    %259 = vmatprep.subr.mxu0 0.0
    %260 = vmatpush2.msra.mxu0 0.0
    %261 = vmatprep.subr.mxu0 0.0
    %262 = vmatpush2.msra.mxu0 0.0
    %263 = vmatprep.subr.mxu0 0.0
    %264 = vmatpush2.msra.mxu0 0.0
    %265 = vmatprep.subr.mxu0 0.0
    %266 = vmatpush2.msra.mxu0 0.0
    %267 = vmatprep.subr.mxu0 0.0
    %268 = vmatpush2.msra.mxu0 0.0
    %269 = vmatprep.subr.mxu0 0.0
    %270 = vmatpush2.msra.mxu0 0.0
    %271 = vmatprep.subr.mxu0 0.0
    %272 = vmatpush2.msra.mxu0 0.0
    %273 = vmatprep.subr.mxu0 0.0
    %274 = vmatpush2.msra.mxu0 0.0
    %275 = vmatprep.subr.mxu0 0.0
    %276 = vmatpush2.msra.mxu0 0.0
    %277 = vmatprep.mubr.f32.mxu0 0.0
    %278 = vmatmul.mubr.f32.gmra.mxu0 %v196
    %v279 = vpop.f32.mrf.mxu0
    %v280 = vadd.f32 0.0, %v279
    %v281 = vpop.f32.mrf.mxu0
    %282 = vdwg.mxu0
    %v283 = vxor.u32 %v280, 2147483648
    %v284 = vmul.f32 %v283, 1.442695
    %v285 = vpow.pop %v284
    %v286 = vadd.f32 %v285, 1.0
    %v287 = vrcp.pop %v286
    %v288 = vmul.f32 1.0, %v287
    %v289 = vlaneseq
    %v290 = vshrl.u32 %v289, 7
    %v291 = vsub.s32 0, %v290
    %v292 = vrot.slane %v288, %v291
    %294 = vbcast.lane.b32.xlu0 %v292, 256
    %v295 = vpop.permute.xlu0 %294
    %s297 = sor.u32 256, 8
    %298 = vbcast.lane.b32.xlu0 %v292, %s297
    %v299 = vpop.permute.xlu0 %298
    %s301 = sor.u32 256, 16
    %302 = vbcast.lane.b32.xlu0 %v292, %s301
    %v303 = vpop.permute.xlu0 %302
    %s305 = sor.u32 256, 24
    %306 = vbcast.lane.b32.xlu0 %v292, %s305
    %v307 = vpop.permute.xlu0 %306
    %v308 = vlaneseq
    %v309 = vshrl.u32 %v308, 7
    %v310 = vsub.s32 1, %v309
    %v311 = vrot.slane %v288, %v310
    %313 = vbcast.lane.b32.xlu0 %v311, 256
    %v314 = vpop.permute.xlu0 %313
    %s316 = sor.u32 256, 8
    %317 = vbcast.lane.b32.xlu0 %v311, %s316
    %v318 = vpop.permute.xlu0 %317
    %s320 = sor.u32 256, 16
    %321 = vbcast.lane.b32.xlu0 %v311, %s320
    %v322 = vpop.permute.xlu0 %321
    %s324 = sor.u32 256, 24
    %325 = vbcast.lane.b32.xlu0 %v311, %s324
    %v326 = vpop.permute.xlu0 %325
    %v327 = vmul.f32 %v15, %v295
    %v328 = vmul.f32 %v16, %v295
    %v329 = vmul.f32 %v17, %v299
    %v330 = vmul.f32 %v18, %v299
    %v331 = vmul.f32 %v19, %v303
    %v332 = vmul.f32 %v20, %v303
    %v333 = vmul.f32 %v21, %v307
    %v334 = vmul.f32 %v22, %v307
    %v335 = vmul.f32 %v23, %v314
    %v336 = vmul.f32 %v24, %v314
    %v337 = vmul.f32 %v25, %v318
    %v338 = vmul.f32 %v26, %v318
    %v339 = vmul.f32 %v27, %v322
    %v340 = vmul.f32 %v28, %v322
    %v341 = vmul.f32 %v29, %v326
    %v342 = vmul.f32 %v30, %v326
    %343 = vst [vmem:[#allocation2] sm:$0xff] %v327
    %344 = vst [vmem:[#allocation2 + $0x8] sm:$0xff] %v328
    %345 = vst [vmem:[#allocation2 + $0x10] sm:$0xff] %v329
    %346 = vst [vmem:[#allocation2 + $0x18] sm:$0xff] %v330
    %347 = vst [vmem:[#allocation2 + $0x20] sm:$0xff] %v331
    %348 = vst [vmem:[#allocation2 + $0x28] sm:$0xff] %v332
    %349 = vst [vmem:[#allocation2 + $0x30] sm:$0xff] %v333
    %350 = vst [vmem:[#allocation2 + $0x38] sm:$0xff] %v334
    %351 = vst [vmem:[#allocation2 + $0x40] sm:$0xff] %v335
    %352 = vst [vmem:[#allocation2 + $0x48] sm:$0xff] %v336
    %353 = vst [vmem:[#allocation2 + $0x50] sm:$0xff] %v337
    %354 = vst [vmem:[#allocation2 + $0x58] sm:$0xff] %v338
    %355 = vst [vmem:[#allocation2 + $0x60] sm:$0xff] %v339
    %356 = vst [vmem:[#allocation2 + $0x68] sm:$0xff] %v340
    %357 = vst [vmem:[#allocation2 + $0x70] sm:$0xff] %v341
    %358 = vst [vmem:[#allocation2 + $0x78] sm:$0xff] %v342
    // Predicated region
    $region14: #{tpu_custom_call.1} parent=1 // pred_check
      _
    $region15: #{tpu_custom_call.1} parent=1 // pred_check_branch
      %360 = sbr.rel (0) target = $region17
    $region16: #{tpu_custom_call.1} parent=1 // pred_region
      %s362 = ssub.s32 2048, 2048
      %363 = vsyncadd [#allocation3], %s362
      %s364 = sshll.u32 [#allocation2], 4
      %s365 = int_to_ptr.vmem [resolvable:$true] %s364
      %370 = dma.vmem_to_hbm [thread:$0]  %s365, 2048, %s3, [#allocation3], 256, 256, 16
    $region17: #{tpu_custom_call.1} parent=1 // pred_fallthru
      _
    // Predicated region
    $region18: #{tpu_custom_call.1} parent=1 // pred_check
      _
    $region19: #{tpu_custom_call.1} parent=1 // pred_check_branch
      %372 = sbr.rel (0) target = $region21
    $region20: #{tpu_custom_call.1} parent=1 // pred_region
      %373 = dma.done [#allocation3], 2048
    $region21: #{tpu_custom_call.1} parent=1 // pred_fallthru
      _
    %374 = vsyncpa [#allocation3], 1

</llo_original>
